<compile_context>
chip_gen: v5e
topology: v5e:2x2
jax: 0.10.0
libtpu: 0.0.40
codegen_flags: <defaults>
</compile_context>

<pallas_src>
import functools

import jax
import jax.numpy as jnp
from jax import lax
from jax.experimental import pallas as pl
from jax.experimental.pallas import tpu as pltpu


def _iln2d_kernel_nchw(eps, n, x_ref, g_ref, b_ref, o_ref):
    # x_ref/o_ref: (1, C, tT, F); g_ref/b_ref: (1, C, 1, F) already float32.
    x = x_ref[...].astype(jnp.float32)
    # Sum over C first (VPU vreg adds), then one cross-lane reduce over F.
    s1 = jnp.sum(jnp.sum(x, axis=1, keepdims=True), axis=3, keepdims=True)      # (1,1,tT,1)
    mean = s1 * (1.0 / n)
    d = x - mean                                                                 # reused below
    s2 = jnp.sum(jnp.sum(d * d, axis=1, keepdims=True), axis=3, keepdims=True)  # centered, >= 0
    var = s2 * (1.0 / (n - 1.0))                                                 # unbiased (ddof=1)
    # The module normalizes by (std + eps) ** 0.5, exactly as written.
    inv = lax.rsqrt(jnp.sqrt(var) + eps)                                         # EUP, no per-elem divide
    o_ref[...] = (d * inv * g_ref[...] + b_ref[...]).astype(o_ref.dtype)


def _iln2d_kernel_cl(eps, n, x_ref, g_ref, b_ref, o_ref):
    # Channels-last view: x_ref/o_ref: (1, tT, C*F); g_ref/b_ref: (1, 1, C*F).
    x = x_ref[...].astype(jnp.float32)
    s1 = jnp.sum(x, axis=2, keepdims=True)            # (1, tT, 1) single cross-lane reduce
    mean = s1 * (1.0 / n)
    d = x - mean
    s2 = jnp.sum(d * d, axis=2, keepdims=True)
    var = s2 * (1.0 / (n - 1.0))
    inv = lax.rsqrt(jnp.sqrt(var) + eps)
    o_ref[...] = (d * inv * g_ref[...] + b_ref[...]).astype(o_ref.dtype)


def _round_down(v, m):
    return (v // m) * m


def _choose_block_rows(T, row_f32_bytes, sublane, target_f32_bytes=4 << 20):
    # ~4 MiB f32-equivalent per block: big enough to amortize per-grid-step
    # overhead on v6e/v7x, small enough that 2x-buffered in+out plus the
    # in-kernel f32 temporaries stay well inside the vmem limit we request
    # (and under v7x's 64 MiB physical VMEM). v5e is covered because we set
    # vmem_limit_bytes explicitly instead of relying on its 16 MiB default.
    rows = target_f32_bytes // max(1, row_f32_bytes)
    if rows >= T:
        return T
    return max(sublane, _round_down(rows, sublane))


def _vmem_limit_bytes(blk_in_bytes, blk_f32_bytes):
    # 2x double-buffered input + output DMA buffers, plus headroom for the
    # f32 upcast / centered-square temporaries, plus slack.
    need = 4 * blk_in_bytes + 4 * blk_f32_bytes + (4 << 20)
    return int(min(48 << 20, max(16 << 20, need)))


def instant_layer_norm_2d(x, gain, bias, eps=1e-5, block_rows=None):
    """x: (B, C, T, F); gain/bias reshapeable to (1, C, 1, F). Returns (B, C, T, F)."""
    B, C, T, F = x.shape
    # dtype-aware sublane multiple: 8 rows f32, 16 bf16/f16, 32 int8/fp8.
    sub = max(8, 32 // x.dtype.itemsize)

    # Lane-density choice:
    #   * F >= 128 (esp. multiples of 128): native layout, no wrapper copies.
    #   * F < 128: channels-last (B, T, C*F) so the store path is C x denser.
    channels_last = (F % 128 != 0) and (F < 128)
    row_elems = C * F
    row_f32_bytes = 4 * row_elems

    if block_rows is None:
        tT = _choose_block_rows(T, row_f32_bytes, sub)
    else:
        tT = max(1, min(int(block_rows), T))
    if tT < T:
        tT = max(sub, _round_down(tT, sub))
        tT = min(tT, T)  # tiny-T fallback: full dim is always a legal block
    # Megacore (v7x has 2 TensorCores): with B == 1 and a single T step one
    # core would idle; split T into >= 2 parallel steps when possible.
    if B == 1 and tT >= T and T >= 2 * sub:
        half = (T + 1) // 2
        cand = max(sub, ((half + sub - 1) // sub) * sub)
        if cand < T:
            tT = cand

    n = float(C * F)  # NOTE: n == 1 divides by zero in ddof=1, matching torch's NaN
    grid = (B, pl.cdiv(T, tT))
    blk_in_bytes = x.dtype.itemsize * row_elems * tT
    blk_f32_bytes = 4 * row_elems * tT
    cparams = pltpu.CompilerParams(
        dimension_semantics=("parallel", "parallel"),
        vmem_limit_bytes=_vmem_limit_bytes(blk_in_bytes, blk_f32_bytes),
    )

    if channels_last:
        CF = C * F
        x_cl = jnp.transpose(x, (0, 2, 1, 3)).reshape(B, T, CF)
        g_cl = gain.reshape(1, 1, CF).astype(jnp.float32)
        b_cl = bias.reshape(1, 1, CF).astype(jnp.float32)
        kernel = functools.partial(_iln2d_kernel_cl, float(eps), n)
        out_cl = pl.pallas_call(
            kernel,
            out_shape=jax.ShapeDtypeStruct((B, T, CF), x.dtype),
            grid_spec=pltpu.PrefetchScalarGridSpec(
                num_scalar_prefetch=0,
                grid=grid,
                in_specs=[
                    pl.BlockSpec((1, tT, CF), lambda bi, ti: (bi, ti, 0)),
                    pl.BlockSpec((1, 1, CF), lambda bi, ti: (0, 0, 0)),
                    pl.BlockSpec((1, 1, CF), lambda bi, ti: (0, 0, 0)),
                ],
                out_specs=pl.BlockSpec((1, tT, CF), lambda bi, ti: (bi, ti, 0)),
            ),
            compiler_params=cparams,
        )(x_cl, g_cl, b_cl)
        return jnp.transpose(out_cl.reshape(B, T, C, F), (0, 2, 1, 3))

    g = gain.reshape(1, C, 1, F).astype(jnp.float32)
    b = bias.reshape(1, C, 1, F).astype(jnp.float32)
    kernel = functools.partial(_iln2d_kernel_nchw, float(eps), n)
    return pl.pallas_call(
        kernel,
        out_shape=jax.ShapeDtypeStruct((B, C, T, F), x.dtype),
        grid_spec=pltpu.PrefetchScalarGridSpec(
            num_scalar_prefetch=0,
            grid=grid,
            in_specs=[
                pl.BlockSpec((1, C, tT, F), lambda bi, ti: (bi, 0, ti, 0)),
                pl.BlockSpec((1, C, 1, F), lambda bi, ti: (0, 0, 0, 0)),
                pl.BlockSpec((1, C, 1, F), lambda bi, ti: (0, 0, 0, 0)),
            ],
            out_specs=pl.BlockSpec((1, C, tT, F), lambda bi, ti: (bi, 0, ti, 0)),
        ),
        compiler_params=cparams,
    )(x, g, b)


def _reference(x, gain, bias, eps=1e-5):
    # pure-JAX reference mirroring the PyTorch forward
    mean = jnp.mean(x, axis=(1, 3), keepdims=True)
    var = jnp.var(x, axis=(1, 3), keepdims=True, ddof=1)   # unbiased, like torch.std
    std = jnp.sqrt(var)
    denom = jnp.sqrt(std + eps)
    return (x - mean) / denom * gain + bias


if __name__ == "__main__":
    kx, kg, kb, kx2 = jax.random.split(jax.random.PRNGKey(0), 4)

    # Test 1: lane-dense frequency axis (F = 128), native-layout path.
    B, C, T, F = 2, 4, 16, 128
    x = jax.random.normal(kx, (B, C, T, F), dtype=jnp.float32)
    gain = 1.0 + 0.1 * jax.random.normal(kg, (1, C, 1, F), dtype=jnp.float32)
    bias = 0.05 * jax.random.normal(kb, (1, C, 1, F), dtype=jnp.float32)

    out = jax.block_until_ready(instant_layer_norm_2d(x, gain, bias, eps=1e-5))
    ref = _reference(x, gain, bias, eps=1e-5)
    assert out.shape == (B, C, T, F)
    assert jnp.allclose(out, ref, atol=1e-4, rtol=1e-4), "mismatch vs reference (main)"

    # Test 2: small F -> channels-last lane-dense path, ragged time blocks
    # (cdiv padding) with an explicit small block_rows.
    B2, C2, T2, F2 = 2, 4, 20, 16
    x2 = jax.random.normal(kx2, (B2, C2, T2, F2), dtype=jnp.float32)
    g2 = jnp.ones((1, C2, 1, F2), dtype=jnp.float32)
    b2 = jnp.zeros((1, C2, 1, F2), dtype=jnp.float32)
    out2 = jax.block_until_ready(
        instant_layer_norm_2d(x2, g2, b2, eps=1e-5, block_rows=8))
    ref2 = _reference(x2, g2, b2, eps=1e-5)
    assert jnp.allclose(out2, ref2, atol=1e-4, rtol=1e-4), "mismatch vs reference (ragged)"

    # Test 3: batch = 1 exercises the megacore time-split (>= 2 grid steps).
    x3 = x[:1]
    out3 = jax.block_until_ready(instant_layer_norm_2d(x3, gain, bias, eps=1e-5))
    ref3 = _reference(x3, gain, bias, eps=1e-5)
    assert jnp.allclose(out3, ref3, atol=1e-4, rtol=1e-4), "mismatch vs reference (B=1)"

    print("KERNEL_OK")
</pallas_src>

<mosaic_0001>
module attributes {stable_mosaic.version = 11 : i64} {
  func.func @_iln2d_kernel_nchw(%arg0: i32, %arg1: i32, %arg2: memref<1x4x16x128xf32, #tpu.memory_space<vmem>>, %arg3: memref<1x4x1x128xf32, #tpu.memory_space<vmem>>, %arg4: memref<1x4x1x128xf32, #tpu.memory_space<vmem>>, %arg5: memref<1x4x16x128xf32, #tpu.memory_space<vmem>>) attributes {dimension_semantics = [#tpu.dimension_semantics<parallel>, #tpu.dimension_semantics<parallel>], iteration_bounds = array<i64: 2, 1>, scalar_prefetch = 0 : i64, scratch_operands = 0 : i64, tpu.core_type = #tpu.core_type<tc>, window_params = [{transform_indices = @transform_0, window_bounds = array<i64: 1, 4, 16, 128>}, {pipeline_mode = #tpu.pipeline_mode<synchronous>, transform_indices = @transform_1, window_bounds = array<i64: 1, 4, 1, 128>}, {pipeline_mode = #tpu.pipeline_mode<synchronous>, transform_indices = @transform_2, window_bounds = array<i64: 1, 4, 1, 128>}, {transform_indices = @transform_3, window_bounds = array<i64: 1, 4, 16, 128>}]} {
    %c0 = arith.constant 0 : index
    %c0_0 = arith.constant 0 : index
    %c0_1 = arith.constant 0 : index
    %c0_2 = arith.constant 0 : index
    %0 = vector.load %arg2[%c0, %c0_0, %c0_1, %c0_2] : memref<1x4x16x128xf32, #tpu.memory_space<vmem>>, vector<1x4x16x128xf32>
    %cst = arith.constant dense<0.000000e+00> : vector<1x16x128xf32>
    %1 = vector.multi_reduction <add>, %0, %cst [1] : vector<1x4x16x128xf32> to vector<1x16x128xf32>
    %2 = vector.shape_cast %1 : vector<1x16x128xf32> to vector<1x1x16x128xf32>
    %cst_3 = arith.constant dense<0.000000e+00> : vector<1x1x16xf32>
    %3 = vector.multi_reduction <add>, %2, %cst_3 [3] : vector<1x1x16x128xf32> to vector<1x1x16xf32>
    %4 = vector.shape_cast %3 : vector<1x1x16xf32> to vector<1x1x16x1xf32>
    %cst_4 = arith.constant 0.001953125 : f32
    %5 = vector.broadcast %cst_4 : f32 to vector<1x1x16x1xf32>
    %6 = arith.mulf %4, %5 : vector<1x1x16x1xf32>
    %7 = vector.broadcast %6 : vector<1x1x16x1xf32> to vector<1x4x16x128xf32>
    %8 = arith.subf %0, %7 : vector<1x4x16x128xf32>
    %9 = arith.mulf %8, %8 : vector<1x4x16x128xf32>
    %cst_5 = arith.constant dense<0.000000e+00> : vector<1x16x128xf32>
    %10 = vector.multi_reduction <add>, %9, %cst_5 [1] : vector<1x4x16x128xf32> to vector<1x16x128xf32>
    %11 = vector.shape_cast %10 : vector<1x16x128xf32> to vector<1x1x16x128xf32>
    %cst_6 = arith.constant dense<0.000000e+00> : vector<1x1x16xf32>
    %12 = vector.multi_reduction <add>, %11, %cst_6 [3] : vector<1x1x16x128xf32> to vector<1x1x16xf32>
    %13 = vector.shape_cast %12 : vector<1x1x16xf32> to vector<1x1x16x1xf32>
    %cst_7 = arith.constant 0.00195694715 : f32
    %14 = vector.broadcast %cst_7 : f32 to vector<1x1x16x1xf32>
    %15 = arith.mulf %13, %14 : vector<1x1x16x1xf32>
    %16 = math.sqrt %15 : vector<1x1x16x1xf32>
    %cst_8 = arith.constant 9.99999974E-6 : f32
    %17 = vector.broadcast %cst_8 : f32 to vector<1x1x16x1xf32>
    %18 = arith.addf %16, %17 : vector<1x1x16x1xf32>
    %19 = math.rsqrt %18 : vector<1x1x16x1xf32>
    %20 = vector.broadcast %19 : vector<1x1x16x1xf32> to vector<1x4x16x128xf32>
    %21 = arith.mulf %8, %20 : vector<1x4x16x128xf32>
    %c0_9 = arith.constant 0 : index
    %c0_10 = arith.constant 0 : index
    %c0_11 = arith.constant 0 : index
    %c0_12 = arith.constant 0 : index
    %22 = vector.load %arg3[%c0_9, %c0_10, %c0_11, %c0_12] : memref<1x4x1x128xf32, #tpu.memory_space<vmem>>, vector<1x4x1x128xf32>
    %23 = vector.broadcast %22 : vector<1x4x1x128xf32> to vector<1x4x16x128xf32>
    %24 = arith.mulf %21, %23 : vector<1x4x16x128xf32>
    %c0_13 = arith.constant 0 : index
    %c0_14 = arith.constant 0 : index
    %c0_15 = arith.constant 0 : index
    %c0_16 = arith.constant 0 : index
    %25 = vector.load %arg4[%c0_13, %c0_14, %c0_15, %c0_16] : memref<1x4x1x128xf32, #tpu.memory_space<vmem>>, vector<1x4x1x128xf32>
    %26 = vector.broadcast %25 : vector<1x4x1x128xf32> to vector<1x4x16x128xf32>
    %27 = arith.addf %24, %26 : vector<1x4x16x128xf32>
    %c0_17 = arith.constant 0 : index
    %c0_18 = arith.constant 0 : index
    %c0_19 = arith.constant 0 : index
    %c0_20 = arith.constant 0 : index
    %28 = vector.load %arg5[%c0_17, %c0_18, %c0_19, %c0_20] : memref<1x4x16x128xf32, #tpu.memory_space<vmem>>, vector<1x4x16x128xf32>
    tpu.vector_store %arg5[%c0_17, %c0_18, %c0_19, %c0_20], %27 {strides = array<i32>} : memref<1x4x16x128xf32, #tpu.memory_space<vmem>>, vector<1x4x16x128xf32>,
    return
  }
  func.func @transform_0(%arg0: i32, %arg1: i32) -> (i32, i32, i32, i32) {
    %c0_i32 = arith.constant 0 : i32
    %c0_i32_0 = arith.constant 0 : i32
    %c0_i32_1 = arith.constant 0 : i32
    return %arg0, %c0_i32, %arg1, %c0_i32_0 : i32, i32, i32, i32
  }
  func.func @transform_1(%arg0: i32, %arg1: i32) -> (i32, i32, i32, i32) {
    %c0_i32 = arith.constant 0 : i32
    %c0_i32_0 = arith.constant 0 : i32
    %c0_i32_1 = arith.constant 0 : i32
    %c0_i32_2 = arith.constant 0 : i32
    %c0_i32_3 = arith.constant 0 : i32
    return %c0_i32, %c0_i32_0, %c0_i32_1, %c0_i32_2 : i32, i32, i32, i32
  }
  func.func @transform_2(%arg0: i32, %arg1: i32) -> (i32, i32, i32, i32) {
    %c0_i32 = arith.constant 0 : i32
    %c0_i32_0 = arith.constant 0 : i32
    %c0_i32_1 = arith.constant 0 : i32
    %c0_i32_2 = arith.constant 0 : i32
    %c0_i32_3 = arith.constant 0 : i32
    return %c0_i32, %c0_i32_0, %c0_i32_1, %c0_i32_2 : i32, i32, i32, i32
  }
  func.func @transform_3(%arg0: i32, %arg1: i32) -> (i32, i32, i32, i32) {
    %c0_i32 = arith.constant 0 : i32
    %c0_i32_0 = arith.constant 0 : i32
    %c0_i32_1 = arith.constant 0 : i32
    return %arg0, %c0_i32, %arg1, %c0_i32_0 : i32, i32, i32, i32
  }
}

</mosaic_0001>

<llo_original>
// kernel: tpu_custom_call.1
$region0: #{tpu_custom_call.1}
  #allocation0 [shape = 'u32[]', space=smem, size = 0x4, offset = 0x4, fixed_abs, tag = 'smem constant byte address 0x4 - core index']
  #allocation1 [shape = 'u32[72,128]{1,0:T(1,128)}', space=vmem, size = 0x9000, scoped, tag = 'internal scratch']
  %s0 = inlined_call_operand.hbm [shape: f32[2,4,16,128], index: 0, kind: input, shape index: {}]
  %s1 = inlined_call_operand.hbm [shape: f32[1,4,1,128], index: 1, kind: input, shape index: {}]
  %s2 = inlined_call_operand.hbm [shape: f32[1,4,1,128], index: 2, kind: input, shape index: {}]
  %s3 = inlined_call_operand.hbm [shape: f32[2,4,16,128], index: 3, kind: output, shape index: {}]
  %s4 = sld [smem:[#allocation0]]
  $region57: #{tpu_custom_call.1} parent=0
    _
  %s6 = ssub.s32 1, %s4
  %s7 = scalar_select 0, %s6, %s4
  $region1: #{tpu_custom_call.1} parent=0
    #allocation2 [shape = 'u8[65536]{0}', space=vmem, size = 0x10000, scoped, tag = 'input window, operand 0']
    #allocation3 [shape = 's32[2]{0}', space=sflag, size = 0x8, scoped, tag = 'scoped memory for tpu_custom_call.1']
    #allocation4 [shape = 's32[2]{0}', space=sflag, size = 0x8, scoped, tag = 'scoped memory for tpu_custom_call.1']
    #allocation5 [shape = 'u8[2048]{0}', space=vmem, size = 0x800, scoped, tag = 'input window, operand 1, single buffered']
    #allocation6 [shape = 's32[1]{0}', space=sflag, size = 0x4, scoped, tag = 'scoped memory for tpu_custom_call.1']
    #allocation7 [shape = 'u8[2048]{0}', space=vmem, size = 0x800, scoped, tag = 'input window, operand 2, single buffered']
    #allocation8 [shape = 'u8[65536]{0}', space=vmem, size = 0x10000, scoped, tag = 'output window, operand 0']
    %8 = vsyncpa [#allocation3], 0
    %s9 = scalar_lea.sflag [#allocation3], 1
    %10 = vsyncpa %s9, 0
    %11 = vsyncpa [#allocation6], 0
    %12 = vsyncpa [#allocation4], 0
    %s13 = scalar_lea.sflag [#allocation4], 1
    %14 = vsyncpa %s13, 0
    loop: start=0, step=1, limit=4
    $region2: #{tpu_custom_call.1} parent=1 // loop_pre_header
      _
    $region3: #{tpu_custom_call.1} parent=1 // loop_header
      %s16 = sphi 0, %s20
      %p17 = scmp.ge.s32.totalorder %s16, 4
      %s23 = sphi 0, %s35
      %s24 = sphi 0, %s31
      %s25 = sphi 0, %s23
      %s26 = sphi 0, %s24
      %s27 = sphi 0, %s25
      %s28 = sphi 0, %s26
      %s40 = sphi 0, %s42
      %s43 = sphi 0, %s40
      %s44 = sphi 0, %s43
      %s60 = sphi 0, %s44
      %s64 = sphi 0, %s64
      %s66 = sphi 0, %s64
      %s67 = sphi 0, %s66
      %s81 = sphi 0, %s67
      %s85 = sphi 0, %s85
      %s87 = sphi 0, %s85
      %s88 = sphi 0, %s87
      %s102 = sphi 0, %s88
      %s110 = sphi 0, %s112
      %s113 = sphi 0, %s110
      %s114 = sphi 0, %s113
      %s130 = sphi 0, %s114
    $region4: #{tpu_custom_call.1} parent=1 // loop_header_branch
      %19 = sbr.rel (%p17) target = $region8
    $region5: #{tpu_custom_call.1} parent=1 // loop_body
      %s21 = ssub.s32 %s16, 1
      %s22 = ssub.s32 %s16, 2
      %s29 = sadd.s32 1, %s24
      %p30 = scmp.ge.s32.totalorder %s29, 1
      %s31 = scalar_select %p30, 0, %s29
      %s32 = sadd.s32 1, %s23
      %s33 = scalar_select %p30, %s32, %s23
      %p34 = scmp.ge.s32.totalorder %s33, 2
      %s35 = scalar_select %p34, 0, %s33
      %s36 = ssub.s32 %s23, %s35
      %s37 = ssub.s32 %s24, %s31
      %s38 = sor.u32 %s36, %s37
      %p39 = scmp.eq.s32.totalorder %s38, 0
      %s41 = sadd.s32 %s40, 1
      %s42 = scalar_select %p39, %s40, %s41
      %p45 = pneg %p39
      %p46 = scmp.eq.s32.totalorder %s16, 1
      %p47 = por %p45, %p46
      %p48 = scmp.ne.s32.totalorder %s40, %s43
      %p49 = scmp.eq.s32.totalorder %s16, 0
      %p50 = por %p48, %p49
      %p51 = scmp.ne.s32.totalorder %s40, %s43
      %p52 = scmp.eq.s32.totalorder %s21, 1
      %p53 = por %p51, %p52
      %p54 = scmp.ne.s32.totalorder %s43, %s44
      %p55 = scmp.eq.s32.totalorder %s21, 0
      %p56 = por %p54, %p55
      %p57 = scmp.ne.s32.totalorder %s43, %s44
      %p58 = scmp.eq.s32.totalorder %s22, 1
      %p59 = por %p57, %p58
      %p61 = scmp.ne.s32.totalorder %s44, %s60
      %p62 = scmp.eq.s32.totalorder %s22, 0
      %p63 = por %p61, %p62
      %s65 = sadd.s32 %s64, 1
      %p68 = scmp.eq.s32.totalorder %s16, 1
      %p69 = scmp.ne.s32.totalorder %s64, %s66
      %p70 = scmp.eq.s32.totalorder %s16, 0
      %p71 = por %p69, %p70
      %p72 = scmp.ne.s32.totalorder %s64, %s66
      %p73 = scmp.eq.s32.totalorder %s21, 1
      %p74 = por %p72, %p73
      %p75 = scmp.ne.s32.totalorder %s66, %s67
      %p76 = scmp.eq.s32.totalorder %s21, 0
      %p77 = por %p75, %p76
      %p78 = scmp.ne.s32.totalorder %s66, %s67
      %p79 = scmp.eq.s32.totalorder %s22, 1
      %p80 = por %p78, %p79
      %p82 = scmp.ne.s32.totalorder %s67, %s81
      %p83 = scmp.eq.s32.totalorder %s22, 0
      %p84 = por %p82, %p83
      %s86 = sadd.s32 %s85, 1
      %p89 = scmp.eq.s32.totalorder %s16, 1
      %p90 = scmp.ne.s32.totalorder %s85, %s87
      %p91 = scmp.eq.s32.totalorder %s16, 0
      %p92 = por %p90, %p91
      %p93 = scmp.ne.s32.totalorder %s85, %s87
      %p94 = scmp.eq.s32.totalorder %s21, 1
      %p95 = por %p93, %p94
      %p96 = scmp.ne.s32.totalorder %s87, %s88
      %p97 = scmp.eq.s32.totalorder %s21, 0
      %p98 = por %p96, %p97
      %p99 = scmp.ne.s32.totalorder %s87, %s88
      %p100 = scmp.eq.s32.totalorder %s22, 1
      %p101 = por %p99, %p100
      %p103 = scmp.ne.s32.totalorder %s88, %s102
      %p104 = scmp.eq.s32.totalorder %s22, 0
      %p105 = por %p103, %p104
      %s106 = ssub.s32 %s23, %s35
      %s107 = ssub.s32 %s24, %s31
      %s108 = sor.u32 %s106, %s107
      %p109 = scmp.eq.s32.totalorder %s108, 0
      %s111 = sadd.s32 %s110, 1
      %s112 = scalar_select %p109, %s110, %s111
      %p115 = pneg %p109
      %p116 = scmp.eq.s32.totalorder %s16, 1
      %p117 = por %p115, %p116
      %p118 = scmp.ne.s32.totalorder %s110, %s113
      %p119 = scmp.eq.s32.totalorder %s16, 0
      %p120 = por %p118, %p119
      %p121 = scmp.ne.s32.totalorder %s110, %s113
      %p122 = scmp.eq.s32.totalorder %s21, 1
      %p123 = por %p121, %p122
      %p124 = scmp.ne.s32.totalorder %s113, %s114
      %p125 = scmp.eq.s32.totalorder %s21, 0
      %p126 = por %p124, %p125
      %p127 = scmp.ne.s32.totalorder %s113, %s114
      %p128 = scmp.eq.s32.totalorder %s22, 1
      %p129 = por %p127, %p128
      %p131 = scmp.ne.s32.totalorder %s114, %s130
      %p132 = scmp.eq.s32.totalorder %s22, 0
      %p133 = por %p131, %p132
      %p134 = scmp.le.s32.totalorder 1, %s16
      %p135 = scmp.lt.s32.totalorder %s16, 3
      %p136 = pnand %p134, %p135
      %p137 = pneg %p136
      // Predicated region
      $region9: #{tpu_custom_call.1} parent=5 // pred_check
        _
      $region10: #{tpu_custom_call.1} parent=5 // pred_check_branch
        %139 = sbr.rel (%p136) target = $region12
      $region11: #{tpu_custom_call.1} parent=5 // pred_region
        %s140 = ssub.s32 %s16, 1
        // Predicated region
        $region13: #{tpu_custom_call.1} parent=11 // pred_check
          %p141 = pneg %p77
        $region14: #{tpu_custom_call.1} parent=11 // pred_check_branch
          %143 = sbr.rel (%p141) target = $region16
        $region15: #{tpu_custom_call.1} parent=11 // pred_region
          %145 = vsyncadd [#allocation6], 0
          %s146 = sshll.u32 %s1, 4
          %s147 = int_to_ptr.hbm [resolvable:$true] %s146
          %s148 = sshll.u32 [#allocation5], 4
          %s149 = int_to_ptr.vmem [resolvable:$true] %s148
          %154 = dma.hbm_to_vmem [thread:$0]  %s147, 64, %s149, [#allocation6], 16, 16, 1
        $region16: #{tpu_custom_call.1} parent=11 // pred_fallthru
          _
        // Predicated region
        $region17: #{tpu_custom_call.1} parent=11 // pred_check
          %p155 = pneg %p98
        $region18: #{tpu_custom_call.1} parent=11 // pred_check_branch
          %157 = sbr.rel (%p155) target = $region20
        $region19: #{tpu_custom_call.1} parent=11 // pred_region
          %159 = vsyncadd [#allocation6], 0
          %s160 = sshll.u32 %s2, 4
          %s161 = int_to_ptr.hbm [resolvable:$true] %s160
          %s162 = sshll.u32 [#allocation7], 4
          %s163 = int_to_ptr.vmem [resolvable:$true] %s162
          %168 = dma.hbm_to_vmem [thread:$0]  %s161, 64, %s163, [#allocation6], 16, 16, 1
        $region20: #{tpu_custom_call.1} parent=11 // pred_fallthru
          _
      $region12: #{tpu_custom_call.1} parent=5 // pred_fallthru
        _
      %p169 = scmp.lt.s32.totalorder %s16, 2
      // Predicated region
      $region21: #{tpu_custom_call.1} parent=5 // pred_check
        %p170 = pneg %p169
      $region22: #{tpu_custom_call.1} parent=5 // pred_check_branch
        %172 = sbr.rel (%p170) target = $region24
      $region23: #{tpu_custom_call.1} parent=5 // pred_region
        // Predicated region
        $region25: #{tpu_custom_call.1} parent=23 // pred_check
          %p173 = pneg %p50
        $region26: #{tpu_custom_call.1} parent=23 // pred_check_branch
          %175 = sbr.rel (%p173) target = $region28
        $region27: #{tpu_custom_call.1} parent=23 // pred_region
          %s176 = sand.u32 %s40, 1
          %s177 = scalar_lea.sflag [#allocation3], %s176
          %s178 = sand.u32 %s40, 1
          %s179 = smul.addr %s178, 64
          %s180 = scalar_lea.vmem [#allocation2], %s179
          %s181 = smul.u32 2, %s24
          %183 = vsyncadd %s177, 0
          %s184 = smul.addr %s23, 8
          %s185 = sadd.s32 %s181, %s184
          %s186 = smul.addr %s185, 8
          %s187 = scalar_lea.hbm %s0, %s186
          %s188 = sshll.u32 %s187, 4
          %s189 = int_to_ptr.hbm [resolvable:$true] %s188
          %s190 = sshll.u32 %s180, 4
          %s191 = int_to_ptr.vmem [resolvable:$true] %s190
          %196 = dma.hbm_to_vmem [thread:$0]  %s189, 1024, %s191, %s177, 128, 128, 8
        $region28: #{tpu_custom_call.1} parent=23 // pred_fallthru
          _
      $region24: #{tpu_custom_call.1} parent=5 // pred_fallthru
        _
      %p197 = scmp.le.s32.totalorder 1, %s16
      %p198 = scmp.lt.s32.totalorder %s16, 3
      %p199 = pnand %p197, %p198
      %p200 = pneg %p199
      // Predicated region
      $region29: #{tpu_custom_call.1} parent=5 // pred_check
        _
      $region30: #{tpu_custom_call.1} parent=5 // pred_check_branch
        %202 = sbr.rel (%p199) target = $region32
      $region31: #{tpu_custom_call.1} parent=5 // pred_region
        %s203 = ssub.s32 %s16, 1
        %s204 = sand.u32 %s43, 1
        %s205 = scalar_lea.sflag [#allocation3], %s204
        %s206 = sand.u32 %s43, 1
        %s207 = smul.addr %s206, 64
        %s208 = scalar_lea.vmem [#allocation2], %s207
        // Predicated region
        $region33: #{tpu_custom_call.1} parent=31 // pred_check
          %p209 = pneg %p56
        $region34: #{tpu_custom_call.1} parent=31 // pred_check_branch
          %211 = sbr.rel (%p209) target = $region36
        $region35: #{tpu_custom_call.1} parent=31 // pred_region
          %213 = dma.done %s205, 1024
        $region36: #{tpu_custom_call.1} parent=31 // pred_fallthru
          _
        // Predicated region
        $region37: #{tpu_custom_call.1} parent=31 // pred_check
          %p214 = pneg %p77
        $region38: #{tpu_custom_call.1} parent=31 // pred_check_branch
          %216 = sbr.rel (%p214) target = $region40
        $region39: #{tpu_custom_call.1} parent=31 // pred_region
          %218 = dma.done [#allocation6], 64
        $region40: #{tpu_custom_call.1} parent=31 // pred_fallthru
          _
        // Predicated region
        $region41: #{tpu_custom_call.1} parent=31 // pred_check
          %p219 = pneg %p98
        $region42: #{tpu_custom_call.1} parent=31 // pred_check_branch
          %221 = sbr.rel (%p219) target = $region44
        $region43: #{tpu_custom_call.1} parent=31 // pred_region
          %223 = dma.done [#allocation6], 64
        $region44: #{tpu_custom_call.1} parent=31 // pred_fallthru
          _
        %s224 = sand.u32 %s43, 1
        %s225 = scalar_lea.sflag [#allocation3], %s224
        %s226 = sand.u32 %s43, 1
        %s227 = smul.addr %s226, 64
        %s228 = scalar_lea.vmem [#allocation2], %s227
        %p229 = pneg %p56
        %p230 = pneg %p53
        %p231 = pneg %p77
        %p232 = pneg %p74
        %p233 = pneg %p98
        %p234 = pneg %p95
        %p235 = pneg %p126
        %p236 = pneg %p123
        %s237 = sand.u32 %s113, 1
        %s238 = scalar_lea.sflag [#allocation4], %s237
        %s239 = sand.u32 %s113, 1
        %s240 = smul.addr %s239, 64
        %s241 = scalar_lea.vmem [#allocation8], %s240
        %s242 = smul.u32 2, %s26
        %s243 = smul.u32 2, %s26
        %v244 = vld [vmem:[%s208] sm:$0xff]
        %v245 = vld [vmem:[%s208 + $0x8] sm:$0xff]
        %v246 = vld [vmem:[%s208 + $0x10] sm:$0xff]
        %v247 = vld [vmem:[%s208 + $0x18] sm:$0xff]
        %v248 = vld [vmem:[%s208 + $0x20] sm:$0xff]
        %v249 = vld [vmem:[%s208 + $0x28] sm:$0xff]
        %v250 = vld [vmem:[%s208 + $0x30] sm:$0xff]
        %v251 = vld [vmem:[%s208 + $0x38] sm:$0xff]
        %v252 = vadd.f32 %v244, %v246
        %v253 = vadd.f32 %v252, %v248
        %v254 = vadd.f32 %v253, %v250
        %v255 = vadd.f32 %v245, %v247
        %v256 = vadd.f32 %v255, %v249
        %v257 = vadd.f32 %v256, %v251
        %258 = vadd.xlane.f32.xlu0 %v254
        %v259 = vpop.xlane.xlu0 %258
        %260 = vadd.xlane.f32.xlu0 %v257
        %v261 = vpop.xlane.xlu0 %260
        %v262 = vmul.f32 %v259, 0.001953125
        %v263 = vmul.f32 %v261, 0.001953125
        %v264 = vsub.f32 %v244, %v262
        %v265 = vsub.f32 %v245, %v263
        %v266 = vsub.f32 %v246, %v262
        %v267 = vsub.f32 %v247, %v263
        %v268 = vsub.f32 %v248, %v262
        %v269 = vsub.f32 %v249, %v263
        %v270 = vsub.f32 %v250, %v262
        %v271 = vsub.f32 %v251, %v263
        %v272 = vmul.f32 %v264, %v264
        %v273 = vmul.f32 %v265, %v265
        %v274 = vmul.f32 %v266, %v266
        %v275 = vmul.f32 %v267, %v267
        %v276 = vmul.f32 %v268, %v268
        %v277 = vmul.f32 %v269, %v269
        %v278 = vmul.f32 %v270, %v270
        %v279 = vmul.f32 %v271, %v271
        %v280 = vadd.f32 %v272, %v274
        %v281 = vadd.f32 %v280, %v276
        %v282 = vadd.f32 %v281, %v278
        %v283 = vadd.f32 %v273, %v275
        %v284 = vadd.f32 %v283, %v277
        %v285 = vadd.f32 %v284, %v279
        %286 = vadd.xlane.f32.xlu0 %v282
        %v287 = vpop.xlane.xlu0 %286
        %288 = vadd.xlane.f32.xlu0 %v285
        %v289 = vpop.xlane.xlu0 %288
        %v290 = vmul.f32 %v287, 0.0019569471
        %v291 = vmul.f32 %v289, 0.0019569471
        %v292 = vrsqrt.pop %v290
        %v293 = vmul.f32 %v292, %v290
        %v294 = vmul.f32 %v293, %v292
        %v295 = vmul.f32 0.5, %v294
        %v296 = vsub.f32 1.5, %v295
        %v297 = vmul.f32 %v292, %v296
        %v298 = vmul.f32 %v290, %v297
        %vm299 = vcmp.eq.f32.partialorder %v290, inf
        %v300 = vsel %vm299, %v290, %v298
        %vm301 = vcmp.eq.f32.partialorder %v290, 0.0
        %v302 = vand.u32 %v290, 2147483648
        %v303 = vsel %vm301, %v302, %v300
        %v304 = vrsqrt.pop %v291
        %v305 = vmul.f32 %v304, %v291
        %v306 = vmul.f32 %v305, %v304
        %v307 = vmul.f32 0.5, %v306
        %v308 = vsub.f32 1.5, %v307
        %v309 = vmul.f32 %v304, %v308
        %v310 = vmul.f32 %v291, %v309
        %vm311 = vcmp.eq.f32.partialorder %v291, inf
        %v312 = vsel %vm311, %v291, %v310
        %vm313 = vcmp.eq.f32.partialorder %v291, 0.0
        %v314 = vand.u32 %v291, 2147483648
        %v315 = vsel %vm313, %v314, %v312
        %v316 = vadd.f32 %v303, 1e-05
        %v317 = vadd.f32 %v315, 1e-05
        %v318 = vrsqrt.pop %v316
        %v319 = vmul.f32 %v318, %v316
        %v320 = vmul.f32 %v319, %v318
        %v321 = vmul.f32 0.5, %v320
        %v322 = vsub.f32 1.5, %v321
        %v323 = vmul.f32 %v318, %v322
        %vm324 = vweird.f32 %v316
        %vm325 = vweird.f32 %v318
        %vm326 = vmor %vm324, %vm325
        %v327 = vsel %vm326, %v318, %v323
        %v328 = vrsqrt.pop %v317
        %v329 = vmul.f32 %v328, %v317
        %v330 = vmul.f32 %v329, %v328
        %v331 = vmul.f32 0.5, %v330
        %v332 = vsub.f32 1.5, %v331
        %v333 = vmul.f32 %v328, %v332
        %vm334 = vweird.f32 %v317
        %vm335 = vweird.f32 %v328
        %vm336 = vmor %vm334, %vm335
        %v337 = vsel %vm336, %v328, %v333
        %v338 = vmul.f32 %v264, %v327
        %v339 = vmul.f32 %v265, %v337
        %v340 = vmul.f32 %v266, %v327
        %v341 = vmul.f32 %v267, %v337
        %v342 = vmul.f32 %v268, %v327
        %v343 = vmul.f32 %v269, %v337
        %v344 = vmul.f32 %v270, %v327
        %v345 = vmul.f32 %v271, %v337
        %v346 = vld [vmem:[#allocation5] sm:$0x1]
        %v347 = vld [vmem:[#allocation5 + $0x1] sm:$0x1]
        %v348 = vld [vmem:[#allocation5 + $0x2] sm:$0x1]
        %v349 = vld [vmem:[#allocation5 + $0x3] sm:$0x1]
        %v354 = vperm.slane %v346, 0
        %v355 = vperm.slane %v347, 0
        %v356 = vperm.slane %v348, 0
        %v357 = vperm.slane %v349, 0
        %v362 = vmul.f32 %v338, %v354
        %v363 = vmul.f32 %v339, %v354
        %v364 = vmul.f32 %v340, %v355
        %v365 = vmul.f32 %v341, %v355
        %v366 = vmul.f32 %v342, %v356
        %v367 = vmul.f32 %v343, %v356
        %v368 = vmul.f32 %v344, %v357
        %v369 = vmul.f32 %v345, %v357
        %v370 = vld [vmem:[#allocation7] sm:$0x1]
        %v371 = vld [vmem:[#allocation7 + $0x1] sm:$0x1]
        %v372 = vld [vmem:[#allocation7 + $0x2] sm:$0x1]
        %v373 = vld [vmem:[#allocation7 + $0x3] sm:$0x1]
        %v378 = vperm.slane %v370, 0
        %v379 = vperm.slane %v371, 0
        %v380 = vperm.slane %v372, 0
        %v381 = vperm.slane %v373, 0
        %v386 = vadd.f32 %v362, %v378
        %v387 = vadd.f32 %v363, %v378
        %v388 = vadd.f32 %v364, %v379
        %v389 = vadd.f32 %v365, %v379
        %v390 = vadd.f32 %v366, %v380
        %v391 = vadd.f32 %v367, %v380
        %v392 = vadd.f32 %v368, %v381
        %v393 = vadd.f32 %v369, %v381
        %394 = vst [vmem:[%s241] sm:$0xff] %v386
        %395 = vst [vmem:[%s241 + $0x8] sm:$0xff] %v387
        %396 = vst [vmem:[%s241 + $0x10] sm:$0xff] %v388
        %397 = vst [vmem:[%s241 + $0x18] sm:$0xff] %v389
        %398 = vst [vmem:[%s241 + $0x20] sm:$0xff] %v390
        %399 = vst [vmem:[%s241 + $0x28] sm:$0xff] %v391
        %400 = vst [vmem:[%s241 + $0x30] sm:$0xff] %v392
        %401 = vst [vmem:[%s241 + $0x38] sm:$0xff] %v393
        %s402 = sand.u32 %s113, 1
        %s403 = scalar_lea.sflag [#allocation4], %s402
        %s404 = sand.u32 %s113, 1
        %s405 = smul.addr %s404, 64
        %s406 = scalar_lea.vmem [#allocation8], %s405
        // Predicated region
        $region45: #{tpu_custom_call.1} parent=31 // pred_check
          %p407 = pneg %p123
        $region46: #{tpu_custom_call.1} parent=31 // pred_check_branch
          %409 = sbr.rel (%p407) target = $region48
        $region47: #{tpu_custom_call.1} parent=31 // pred_region
          %s410 = smul.u32 2, %s26
          %412 = vsyncadd %s403, 0
          %s413 = smul.addr %s25, 8
          %s414 = sadd.s32 %s410, %s413
          %s415 = smul.addr %s414, 8
          %s416 = scalar_lea.hbm %s3, %s415
          %s417 = sshll.u32 %s406, 4
          %s418 = int_to_ptr.vmem [resolvable:$true] %s417
          %s419 = sshll.u32 %s416, 4
          %s420 = int_to_ptr.hbm [resolvable:$true] %s419
          %425 = dma.vmem_to_hbm [thread:$0]  %s418, 1024, %s420, %s403, 128, 128, 8
        $region48: #{tpu_custom_call.1} parent=31 // pred_fallthru
          _
      $region32: #{tpu_custom_call.1} parent=5 // pred_fallthru
        _
      %p426 = scmp.le.s32.totalorder 2, %s16
      // Predicated region
      $region49: #{tpu_custom_call.1} parent=5 // pred_check
        %p427 = pneg %p426
      $region50: #{tpu_custom_call.1} parent=5 // pred_check_branch
        %429 = sbr.rel (%p427) target = $region52
      $region51: #{tpu_custom_call.1} parent=5 // pred_region
        %s430 = ssub.s32 %s16, 2
        // Predicated region
        $region53: #{tpu_custom_call.1} parent=51 // pred_check
          %p431 = pneg %p129
        $region54: #{tpu_custom_call.1} parent=51 // pred_check_branch
          %433 = sbr.rel (%p431) target = $region56
        $region55: #{tpu_custom_call.1} parent=51 // pred_region
          %s434 = sand.u32 %s114, 1
          %s435 = scalar_lea.sflag [#allocation4], %s434
          %s436 = sand.u32 %s114, 1
          %s437 = smul.addr %s436, 64
          %s438 = scalar_lea.vmem [#allocation8], %s437
          %440 = dma.done %s435, 1024
        $region56: #{tpu_custom_call.1} parent=51 // pred_fallthru
          _
      $region52: #{tpu_custom_call.1} parent=5 // pred_fallthru
        _
    $region6: #{tpu_custom_call.1} parent=1 // loop_footer
      %s20 = sadd.s32 1, %s16
    $region7: #{tpu_custom_call.1} parent=1 // loop_footer_branch
      %15 = sbr.rel target = $region3
    $region8: #{tpu_custom_call.1} parent=1 // loop_exit
      _
    %441 = vsyncpa [#allocation3], 1
    %s442 = scalar_lea.sflag [#allocation3], 1
    %443 = vsyncpa %s442, 1
    %444 = vsyncpa [#allocation6], 1
    %445 = vsyncpa [#allocation4], 1
    %s446 = scalar_lea.sflag [#allocation4], 1
    %447 = vsyncpa %s446, 1

</llo_original>
